<compile_context>
chip_gen: v6e
topology: v6e:2x2x1
jax: 0.10.0
libtpu: 0.0.40
codegen_flags: <defaults>
</compile_context>

<pallas_src>
import jax
import jax.numpy as jnp
from jax.experimental import pallas as pl
from jax.experimental.pallas import tpu as pltpu


def rope_kernel(x_ref, cos_ref, sin_ref, rot_ref, o_ref):
    # x_ref, o_ref     : (TS, D)  one (batch element, seq-tile) slab (batch squeezed)
    # cos_ref, sin_ref : (TS, D)  repeat-interleaved position tables for this tile
    # rot_ref          : (D, D)   signed pair-swap permutation, grid-invariant
    x = x_ref[...]
    x_rot = jnp.dot(x, rot_ref[...], preferred_element_type=jnp.float32)
    o_ref[...] = (x * cos_ref[...] + x_rot * sin_ref[...]).astype(o_ref.dtype)


def _make_rotation_matrix(d_model, dtype):
    # x2 = x @ R with x2[2i] = -x[2i+1], x2[2i+1] = x[2i]
    half = d_model // 2
    ev = 2 * jnp.arange(half)
    od = ev + 1
    rot = jnp.zeros((d_model, d_model), dtype)
    rot = rot.at[od, ev].set(-1)
    rot = rot.at[ev, od].set(1)
    return rot


def _choose_seq_tile(seq_len, max_tile=512):
    for cand in (512, 256, 128, 64, 32, 16, 8):
        if cand <= max_tile and seq_len % cand == 0:
            return cand
    return seq_len  # small / ragged seq: single full-extent block (always legal)


def rotate_positional_encoding(x, cos_embeddings, sin_embeddings, *, seq_tile=None):
    """x: (B, S, D).  cos/sin_embeddings: (max_len, D//2) as in the module ctor."""
    B, S, D = x.shape
    assert D % 2 == 0, "d_model must be even"
    assert cos_embeddings.shape[0] >= S and sin_embeddings.shape[0] >= S

    # repeat_interleave(2, dim=-1) applied once to the small (S, D//2) tables,
    # never to the (B, S, D) activations.
    cos_pos = jnp.repeat(cos_embeddings[:S].astype(x.dtype), 2, axis=-1)  # (S, D)
    sin_pos = jnp.repeat(sin_embeddings[:S].astype(x.dtype), 2, axis=-1)  # (S, D)
    rot = _make_rotation_matrix(D, x.dtype)                               # (D, D)

    ts = seq_tile if seq_tile is not None else _choose_seq_tile(S)
    assert S % ts == 0, "seq_tile must divide seq_len"

    itemsize = jnp.dtype(x.dtype).itemsize
    # double-buffered x/out/cos/sin blocks + double-buffered rot + slack
    vmem_needed = itemsize * (8 * ts * D + 2 * D * D) + (4 << 20)
    vmem_limit = int(min(max(vmem_needed, 32 << 20), 64 << 20))

    grid = (S // ts, B)  # batch innermost -> cos/sin blocks reused across batch

    return pl.pallas_call(
        rope_kernel,
        out_shape=jax.ShapeDtypeStruct((B, S, D), x.dtype),
        grid_spec=pltpu.PrefetchScalarGridSpec(
            num_scalar_prefetch=0,
            grid=grid,
            in_specs=[
                pl.BlockSpec((None, ts, D), lambda s, b: (b, s, 0)),  # x (batch squeezed)
                pl.BlockSpec((ts, D), lambda s, b: (s, 0)),           # cos_pos
                pl.BlockSpec((ts, D), lambda s, b: (s, 0)),           # sin_pos
                pl.BlockSpec((D, D), lambda s, b: (0, 0)),            # rot (invariant)
            ],
            out_specs=pl.BlockSpec((None, ts, D), lambda s, b: (b, s, 0)),
        ),
        compiler_params=pltpu.CompilerParams(
            dimension_semantics=("parallel", "parallel"),
            vmem_limit_bytes=vmem_limit,
        ),
    )(x, cos_pos, sin_pos, rot)


class RotatePositionalEncodingPallas:
    """JAX/Pallas port of the PyTorch RotatePostionalEncoding module."""

    def __init__(self, d_model, max_len, dtype=jnp.float32):
        position = jnp.arange(max_len, dtype=jnp.float32)[:, None]      # (L, 1)
        ids = jnp.arange(d_model // 2, dtype=jnp.float32)               # (D/2,)
        theta = jnp.power(1000.0, -2.0 * ids / d_model)                 # (D/2,)
        embeddings = position * theta                                   # (L, D/2)
        # NOTE: attribute names follow the PyTorch module (they are swapped there).
        self.cos_embeddings = jnp.sin(embeddings).astype(dtype)
        self.sin_embeddings = jnp.cos(embeddings).astype(dtype)
        self.d_model = d_model
        self.max_len = max_len

    def __call__(self, x, *, seq_tile=None):
        return rotate_positional_encoding(
            x, self.cos_embeddings, self.sin_embeddings, seq_tile=seq_tile)


if __name__ == "__main__":
    d_model = 128    # lane-dense last dim (multiple of 128)
    max_len = 16
    batch, seq = 2, 8

    key = jax.random.PRNGKey(0)
    x = jax.random.normal(key, (batch, seq, d_model), jnp.float32)

    rope = RotatePositionalEncodingPallas(d_model, max_len)
    out = jax.block_until_ready(rope(x))

    # Pure-JAX reference mirroring the PyTorch forward exactly.
    cos_pos = jnp.repeat(rope.cos_embeddings[:seq], 2, axis=-1)[None]
    sin_pos = jnp.repeat(rope.sin_embeddings[:seq], 2, axis=-1)[None]
    x2 = jnp.stack([-x[..., 1::2], x[..., 0::2]], axis=-1).reshape(x.shape)
    ref = x * cos_pos + x2 * sin_pos

    assert out.shape == (batch, seq, d_model)
    assert jnp.allclose(out, ref, atol=1e-5, rtol=1e-5)
    print("KERNEL_OK")
</pallas_src>

<mosaic_0001>
module attributes {stable_mosaic.version = 11 : i64} {
  func.func @rope_kernel(%arg0: i32, %arg1: i32, %arg2: memref<1x8x128xf32, #tpu.memory_space<vmem>>, %arg3: memref<8x128xf32, #tpu.memory_space<vmem>>, %arg4: memref<8x128xf32, #tpu.memory_space<vmem>>, %arg5: memref<128x128xf32, #tpu.memory_space<vmem>>, %arg6: memref<1x8x128xf32, #tpu.memory_space<vmem>>) attributes {dimension_semantics = [#tpu.dimension_semantics<parallel>, #tpu.dimension_semantics<parallel>], iteration_bounds = array<i64: 1, 2>, scalar_prefetch = 0 : i64, scratch_operands = 0 : i64, tpu.core_type = #tpu.core_type<tc>, window_params = [{transform_indices = @transform_0, window_bounds = array<i64: 1, 8, 128>}, {transform_indices = @transform_1, window_bounds = array<i64: 8, 128>}, {transform_indices = @transform_2, window_bounds = array<i64: 8, 128>}, {pipeline_mode = #tpu.pipeline_mode<synchronous>, transform_indices = @transform_3, window_bounds = array<i64: 128, 128>}, {transform_indices = @transform_4, window_bounds = array<i64: 1, 8, 128>}]} {
    %c0 = arith.constant 0 : index
    %c0_0 = arith.constant 0 : index
    %c0_1 = arith.constant 0 : index
    %0 = vector.load %arg2[%c0, %c0_0, %c0_1] : memref<1x8x128xf32, #tpu.memory_space<vmem>>, vector<1x8x128xf32>
    %1 = vector.shape_cast %0 : vector<1x8x128xf32> to vector<8x128xf32>
    %c0_2 = arith.constant 0 : index
    %c0_3 = arith.constant 0 : index
    %2 = vector.load %arg5[%c0_2, %c0_3] : memref<128x128xf32, #tpu.memory_space<vmem>>, vector<128x128xf32>
    %cst = arith.constant dense<0.000000e+00> : vector<8x128xf32>
    %3 = tpu.matmul %1, %2, %cst {dimension_numbers = #tpu.dot_dimension_numbers<[1], [0], [0], [1], [0, 0, 1, 1], [], []>} : vector<8x128xf32>, vector<128x128xf32>, vector<8x128xf32> -> vector<8x128xf32>
    %c0_4 = arith.constant 0 : index
    %c0_5 = arith.constant 0 : index
    %4 = vector.load %arg3[%c0_4, %c0_5] : memref<8x128xf32, #tpu.memory_space<vmem>>, vector<8x128xf32>
    %5 = arith.mulf %1, %4 : vector<8x128xf32>
    %c0_6 = arith.constant 0 : index
    %c0_7 = arith.constant 0 : index
    %6 = vector.load %arg4[%c0_6, %c0_7] : memref<8x128xf32, #tpu.memory_space<vmem>>, vector<8x128xf32>
    %7 = arith.mulf %3, %6 : vector<8x128xf32>
    %8 = arith.addf %5, %7 : vector<8x128xf32>
    %c0_8 = arith.constant 0 : index
    %c0_9 = arith.constant 0 : index
    %c0_10 = arith.constant 0 : index
    %9 = vector.load %arg6[%c0_8, %c0_9, %c0_10] : memref<1x8x128xf32, #tpu.memory_space<vmem>>, vector<1x8x128xf32>
    %10 = vector.shape_cast %9 : vector<1x8x128xf32> to vector<8x128xf32>
    %11 = vector.shape_cast %8 : vector<8x128xf32> to vector<1x8x128xf32>
    tpu.vector_store %arg6[%c0_8, %c0_9, %c0_10], %11 {strides = array<i32>} : memref<1x8x128xf32, #tpu.memory_space<vmem>>, vector<1x8x128xf32>,
    return
  }
  func.func @transform_0(%arg0: i32, %arg1: i32) -> (i32, i32, i32) {
    %c0_i32 = arith.constant 0 : i32
    %c0_i32_0 = arith.constant 0 : i32
    return %arg1, %arg0, %c0_i32 : i32, i32, i32
  }
  func.func @transform_1(%arg0: i32, %arg1: i32) -> (i32, i32) {
    %c0_i32 = arith.constant 0 : i32
    %c0_i32_0 = arith.constant 0 : i32
    return %arg0, %c0_i32 : i32, i32
  }
  func.func @transform_2(%arg0: i32, %arg1: i32) -> (i32, i32) {
    %c0_i32 = arith.constant 0 : i32
    %c0_i32_0 = arith.constant 0 : i32
    return %arg0, %c0_i32 : i32, i32
  }
  func.func @transform_3(%arg0: i32, %arg1: i32) -> (i32, i32) {
    %c0_i32 = arith.constant 0 : i32
    %c0_i32_0 = arith.constant 0 : i32
    %c0_i32_1 = arith.constant 0 : i32
    return %c0_i32, %c0_i32_0 : i32, i32
  }
  func.func @transform_4(%arg0: i32, %arg1: i32) -> (i32, i32, i32) {
    %c0_i32 = arith.constant 0 : i32
    %c0_i32_0 = arith.constant 0 : i32
    return %arg1, %arg0, %c0_i32 : i32, i32, i32
  }
}

</mosaic_0001>

<llo_original>
// kernel: tpu_custom_call.1
$region0: #{tpu_custom_call.1}
  #allocation0 [shape = 'u32[]', space=smem, size = 0x4, offset = 0x4, fixed_abs, tag = 'smem constant byte address 0x4 - core index']
  #allocation1 [shape = 'u32[144,128]{1,0:T(1,128)}', space=vmem, size = 0x12000, scoped, tag = 'internal scratch']
  %s0 = inlined_call_operand.hbm [shape: f32[2,8,128], index: 0, kind: input, shape index: {}]
  %s1 = inlined_call_operand.hbm [shape: f32[8,128], index: 1, kind: input, shape index: {}]
  %s2 = inlined_call_operand.hbm [shape: f32[8,128], index: 2, kind: input, shape index: {}]
  %s3 = inlined_call_operand.hbm [shape: f32[128,128], index: 3, kind: input, shape index: {}]
  %s4 = inlined_call_operand.hbm [shape: f32[2,8,128], index: 4, kind: output, shape index: {}]
  %s5 = sld [smem:[#allocation0]]
  $region65: #{tpu_custom_call.1} parent=0
    _
  %s7 = ssub.s32 1, %s5
  %s8 = scalar_select 0, %s7, %s5
  $region1: #{tpu_custom_call.1} parent=0
    #allocation2 [shape = 'u8[8192]{0}', space=vmem, size = 0x2000, scoped, tag = 'input window, operand 0']
    #allocation3 [shape = 's32[2]{0}', space=sflag, size = 0x8, scoped, tag = 'scoped memory for tpu_custom_call.1']
    #allocation4 [shape = 's32[2]{0}', space=sflag, size = 0x8, scoped, tag = 'scoped memory for tpu_custom_call.1']
    #allocation5 [shape = 'u8[4096]{0}', space=vmem, size = 0x1000, scoped, tag = 'input window, operand 1, single buffered']
    #allocation6 [shape = 's32[1]{0}', space=sflag, size = 0x4, scoped, tag = 'scoped memory for tpu_custom_call.1']
    #allocation7 [shape = 'u8[4096]{0}', space=vmem, size = 0x1000, scoped, tag = 'input window, operand 2, single buffered']
    #allocation8 [shape = 'u8[65536]{0}', space=vmem, size = 0x10000, scoped, tag = 'input window, operand 3, single buffered']
    #allocation9 [shape = 's32[1]{0}', space=sflag, size = 0x4, scoped, tag = 'scoped memory for tpu_custom_call.1']
    #allocation10 [shape = 'u8[8192]{0}', space=vmem, size = 0x2000, scoped, tag = 'output window, operand 0']
    %9 = vsyncpa [#allocation3], 0
    %s10 = scalar_lea.sflag [#allocation3], 1
    %11 = vsyncpa %s10, 0
    %12 = vsyncpa [#allocation6], 0
    %13 = vsyncpa [#allocation9], 0
    %14 = vsyncpa [#allocation4], 0
    %s15 = scalar_lea.sflag [#allocation4], 1
    %16 = vsyncpa %s15, 0
    loop: start=0, step=1, limit=4
    $region2: #{tpu_custom_call.1} parent=1 // loop_pre_header
      _
    $region3: #{tpu_custom_call.1} parent=1 // loop_header
      %s18 = sphi 0, %s22
      %p19 = scmp.ge.s32.totalorder %s18, 4
      %s25 = sphi 0, %s37
      %s26 = sphi 0, %s33
      %s27 = sphi 0, %s25
      %s28 = sphi 0, %s26
      %s29 = sphi 0, %s27
      %s30 = sphi 0, %s28
      %s42 = sphi 0, %s44
      %s45 = sphi 0, %s42
      %s46 = sphi 0, %s45
      %s62 = sphi 0, %s46
      %s68 = sphi 0, %s70
      %s71 = sphi 0, %s68
      %s72 = sphi 0, %s71
      %s88 = sphi 0, %s72
      %s94 = sphi 0, %s96
      %s97 = sphi 0, %s94
      %s98 = sphi 0, %s97
      %s114 = sphi 0, %s98
      %s118 = sphi 0, %s118
      %s120 = sphi 0, %s118
      %s121 = sphi 0, %s120
      %s135 = sphi 0, %s121
      %s143 = sphi 0, %s145
      %s146 = sphi 0, %s143
      %s147 = sphi 0, %s146
      %s163 = sphi 0, %s147
    $region4: #{tpu_custom_call.1} parent=1 // loop_header_branch
      %21 = sbr.rel (%p19) target = $region8
    $region5: #{tpu_custom_call.1} parent=1 // loop_body
      %s23 = ssub.s32 %s18, 1
      %s24 = ssub.s32 %s18, 2
      %s31 = sadd.s32 1, %s26
      %p32 = scmp.ge.s32.totalorder %s31, 2
      %s33 = scalar_select %p32, 0, %s31
      %s34 = sadd.s32 1, %s25
      %s35 = scalar_select %p32, %s34, %s25
      %p36 = scmp.ge.s32.totalorder %s35, 1
      %s37 = scalar_select %p36, 0, %s35
      %s38 = ssub.s32 %s26, %s33
      %s39 = ssub.s32 %s25, %s37
      %s40 = sor.u32 %s38, %s39
      %p41 = scmp.eq.s32.totalorder %s40, 0
      %s43 = sadd.s32 %s42, 1
      %s44 = scalar_select %p41, %s42, %s43
      %p47 = pneg %p41
      %p48 = scmp.eq.s32.totalorder %s18, 1
      %p49 = por %p47, %p48
      %p50 = scmp.ne.s32.totalorder %s42, %s45
      %p51 = scmp.eq.s32.totalorder %s18, 0
      %p52 = por %p50, %p51
      %p53 = scmp.ne.s32.totalorder %s42, %s45
      %p54 = scmp.eq.s32.totalorder %s23, 1
      %p55 = por %p53, %p54
      %p56 = scmp.ne.s32.totalorder %s45, %s46
      %p57 = scmp.eq.s32.totalorder %s23, 0
      %p58 = por %p56, %p57
      %p59 = scmp.ne.s32.totalorder %s45, %s46
      %p60 = scmp.eq.s32.totalorder %s24, 1
      %p61 = por %p59, %p60
      %p63 = scmp.ne.s32.totalorder %s46, %s62
      %p64 = scmp.eq.s32.totalorder %s24, 0
      %p65 = por %p63, %p64
      %s66 = ssub.s32 %s25, %s37
      %p67 = scmp.eq.s32.totalorder %s66, 0
      %s69 = sadd.s32 %s68, 1
      %s70 = scalar_select %p67, %s68, %s69
      %p73 = pneg %p67
      %p74 = scmp.eq.s32.totalorder %s18, 1
      %p75 = por %p73, %p74
      %p76 = scmp.ne.s32.totalorder %s68, %s71
      %p77 = scmp.eq.s32.totalorder %s18, 0
      %p78 = por %p76, %p77
      %p79 = scmp.ne.s32.totalorder %s68, %s71
      %p80 = scmp.eq.s32.totalorder %s23, 1
      %p81 = por %p79, %p80
      %p82 = scmp.ne.s32.totalorder %s71, %s72
      %p83 = scmp.eq.s32.totalorder %s23, 0
      %p84 = por %p82, %p83
      %p85 = scmp.ne.s32.totalorder %s71, %s72
      %p86 = scmp.eq.s32.totalorder %s24, 1
      %p87 = por %p85, %p86
      %p89 = scmp.ne.s32.totalorder %s72, %s88
      %p90 = scmp.eq.s32.totalorder %s24, 0
      %p91 = por %p89, %p90
      %s92 = ssub.s32 %s25, %s37
      %p93 = scmp.eq.s32.totalorder %s92, 0
      %s95 = sadd.s32 %s94, 1
      %s96 = scalar_select %p93, %s94, %s95
      %p99 = pneg %p93
      %p100 = scmp.eq.s32.totalorder %s18, 1
      %p101 = por %p99, %p100
      %p102 = scmp.ne.s32.totalorder %s94, %s97
      %p103 = scmp.eq.s32.totalorder %s18, 0
      %p104 = por %p102, %p103
      %p105 = scmp.ne.s32.totalorder %s94, %s97
      %p106 = scmp.eq.s32.totalorder %s23, 1
      %p107 = por %p105, %p106
      %p108 = scmp.ne.s32.totalorder %s97, %s98
      %p109 = scmp.eq.s32.totalorder %s23, 0
      %p110 = por %p108, %p109
      %p111 = scmp.ne.s32.totalorder %s97, %s98
      %p112 = scmp.eq.s32.totalorder %s24, 1
      %p113 = por %p111, %p112
      %p115 = scmp.ne.s32.totalorder %s98, %s114
      %p116 = scmp.eq.s32.totalorder %s24, 0
      %p117 = por %p115, %p116
      %s119 = sadd.s32 %s118, 1
      %p122 = scmp.eq.s32.totalorder %s18, 1
      %p123 = scmp.ne.s32.totalorder %s118, %s120
      %p124 = scmp.eq.s32.totalorder %s18, 0
      %p125 = por %p123, %p124
      %p126 = scmp.ne.s32.totalorder %s118, %s120
      %p127 = scmp.eq.s32.totalorder %s23, 1
      %p128 = por %p126, %p127
      %p129 = scmp.ne.s32.totalorder %s120, %s121
      %p130 = scmp.eq.s32.totalorder %s23, 0
      %p131 = por %p129, %p130
      %p132 = scmp.ne.s32.totalorder %s120, %s121
      %p133 = scmp.eq.s32.totalorder %s24, 1
      %p134 = por %p132, %p133
      %p136 = scmp.ne.s32.totalorder %s121, %s135
      %p137 = scmp.eq.s32.totalorder %s24, 0
      %p138 = por %p136, %p137
      %s139 = ssub.s32 %s26, %s33
      %s140 = ssub.s32 %s25, %s37
      %s141 = sor.u32 %s139, %s140
      %p142 = scmp.eq.s32.totalorder %s141, 0
      %s144 = sadd.s32 %s143, 1
      %s145 = scalar_select %p142, %s143, %s144
      %p148 = pneg %p142
      %p149 = scmp.eq.s32.totalorder %s18, 1
      %p150 = por %p148, %p149
      %p151 = scmp.ne.s32.totalorder %s143, %s146
      %p152 = scmp.eq.s32.totalorder %s18, 0
      %p153 = por %p151, %p152
      %p154 = scmp.ne.s32.totalorder %s143, %s146
      %p155 = scmp.eq.s32.totalorder %s23, 1
      %p156 = por %p154, %p155
      %p157 = scmp.ne.s32.totalorder %s146, %s147
      %p158 = scmp.eq.s32.totalorder %s23, 0
      %p159 = por %p157, %p158
      %p160 = scmp.ne.s32.totalorder %s146, %s147
      %p161 = scmp.eq.s32.totalorder %s24, 1
      %p162 = por %p160, %p161
      %p164 = scmp.ne.s32.totalorder %s147, %s163
      %p165 = scmp.eq.s32.totalorder %s24, 0
      %p166 = por %p164, %p165
      %p167 = scmp.le.s32.totalorder 1, %s18
      %p168 = scmp.lt.s32.totalorder %s18, 3
      %p169 = pnand %p167, %p168
      %p170 = pneg %p169
      // Predicated region
      $region9: #{tpu_custom_call.1} parent=5 // pred_check
        _
      $region10: #{tpu_custom_call.1} parent=5 // pred_check_branch
        %172 = sbr.rel (%p169) target = $region12
      $region11: #{tpu_custom_call.1} parent=5 // pred_region
        %s173 = ssub.s32 %s18, 1
        // Predicated region
        $region13: #{tpu_custom_call.1} parent=11 // pred_check
          %p174 = pneg %p84
        $region14: #{tpu_custom_call.1} parent=11 // pred_check_branch
          %176 = sbr.rel (%p174) target = $region16
        $region15: #{tpu_custom_call.1} parent=11 // pred_region
          %s178 = ssub.s32 128, 128
          %179 = vsyncadd [#allocation6], %s178
          %s180 = smul.addr %s27, 128
          %s181 = scalar_lea.hbm %s1, %s180
          %s183 = sshll.u32 [#allocation5], 4
          %s184 = int_to_ptr.vmem [resolvable:$true] %s183
          %186 = dma.hbm_to_vmem [thread:$0]  %s181, 128, %s184, [#allocation6]
        $region16: #{tpu_custom_call.1} parent=11 // pred_fallthru
          _
        // Predicated region
        $region17: #{tpu_custom_call.1} parent=11 // pred_check
          %p187 = pneg %p110
        $region18: #{tpu_custom_call.1} parent=11 // pred_check_branch
          %189 = sbr.rel (%p187) target = $region20
        $region19: #{tpu_custom_call.1} parent=11 // pred_region
          %s191 = ssub.s32 128, 128
          %192 = vsyncadd [#allocation6], %s191
          %s193 = smul.addr %s27, 128
          %s194 = scalar_lea.hbm %s2, %s193
          %s196 = sshll.u32 [#allocation7], 4
          %s197 = int_to_ptr.vmem [resolvable:$true] %s196
          %199 = dma.hbm_to_vmem [thread:$0]  %s194, 128, %s197, [#allocation6]
        $region20: #{tpu_custom_call.1} parent=11 // pred_fallthru
          _
        // Predicated region
        $region21: #{tpu_custom_call.1} parent=11 // pred_check
          %p200 = pneg %p131
        $region22: #{tpu_custom_call.1} parent=11 // pred_check_branch
          %202 = sbr.rel (%p200) target = $region24
        $region23: #{tpu_custom_call.1} parent=11 // pred_region
          %s204 = ssub.s32 2048, 2048
          %205 = vsyncadd [#allocation9], %s204
          %s206 = sshll.u32 [#allocation8], 4
          %s207 = int_to_ptr.vmem [resolvable:$true] %s206
          %212 = dma.hbm_to_vmem [thread:$0]  %s3, 2048, %s207, [#allocation9], 128, 128, 8
        $region24: #{tpu_custom_call.1} parent=11 // pred_fallthru
          _
      $region12: #{tpu_custom_call.1} parent=5 // pred_fallthru
        _
      %p213 = scmp.lt.s32.totalorder %s18, 2
      // Predicated region
      $region25: #{tpu_custom_call.1} parent=5 // pred_check
        %p214 = pneg %p213
      $region26: #{tpu_custom_call.1} parent=5 // pred_check_branch
        %216 = sbr.rel (%p214) target = $region28
      $region27: #{tpu_custom_call.1} parent=5 // pred_region
        // Predicated region
        $region29: #{tpu_custom_call.1} parent=27 // pred_check
          %p217 = pneg %p52
        $region30: #{tpu_custom_call.1} parent=27 // pred_check_branch
          %219 = sbr.rel (%p217) target = $region32
        $region31: #{tpu_custom_call.1} parent=27 // pred_region
          %s220 = sand.u32 %s42, 1
          %s221 = scalar_lea.sflag [#allocation3], %s220
          %s222 = sand.u32 %s42, 1
          %s223 = smul.addr %s222, 8
          %s224 = scalar_lea.vmem [#allocation2], %s223
          %s226 = ssub.s32 128, 128
          %227 = vsyncadd %s221, %s226
          %s228 = sadd.s32 %s25, %s26
          %s229 = smul.addr %s228, 128
          %s230 = scalar_lea.hbm %s0, %s229
          %s232 = sshll.u32 %s224, 4
          %s233 = int_to_ptr.vmem [resolvable:$true] %s232
          %235 = dma.hbm_to_vmem [thread:$0]  %s230, 128, %s233, %s221
        $region32: #{tpu_custom_call.1} parent=27 // pred_fallthru
          _
      $region28: #{tpu_custom_call.1} parent=5 // pred_fallthru
        _
      %p236 = scmp.le.s32.totalorder 1, %s18
      %p237 = scmp.lt.s32.totalorder %s18, 3
      %p238 = pnand %p236, %p237
      %p239 = pneg %p238
      // Predicated region
      $region33: #{tpu_custom_call.1} parent=5 // pred_check
        _
      $region34: #{tpu_custom_call.1} parent=5 // pred_check_branch
        %241 = sbr.rel (%p238) target = $region36
      $region35: #{tpu_custom_call.1} parent=5 // pred_region
        %s242 = ssub.s32 %s18, 1
        %s243 = sand.u32 %s45, 1
        %s244 = scalar_lea.sflag [#allocation3], %s243
        %s245 = sand.u32 %s45, 1
        %s246 = smul.addr %s245, 8
        %s247 = scalar_lea.vmem [#allocation2], %s246
        // Predicated region
        $region37: #{tpu_custom_call.1} parent=35 // pred_check
          %p248 = pneg %p58
        $region38: #{tpu_custom_call.1} parent=35 // pred_check_branch
          %250 = sbr.rel (%p248) target = $region40
        $region39: #{tpu_custom_call.1} parent=35 // pred_region
          %251 = dma.done %s244, 128
        $region40: #{tpu_custom_call.1} parent=35 // pred_fallthru
          _
        // Predicated region
        $region41: #{tpu_custom_call.1} parent=35 // pred_check
          %p252 = pneg %p84
        $region42: #{tpu_custom_call.1} parent=35 // pred_check_branch
          %254 = sbr.rel (%p252) target = $region44
        $region43: #{tpu_custom_call.1} parent=35 // pred_region
          %255 = dma.done [#allocation6], 128
        $region44: #{tpu_custom_call.1} parent=35 // pred_fallthru
          _
        // Predicated region
        $region45: #{tpu_custom_call.1} parent=35 // pred_check
          %p256 = pneg %p110
        $region46: #{tpu_custom_call.1} parent=35 // pred_check_branch
          %258 = sbr.rel (%p256) target = $region48
        $region47: #{tpu_custom_call.1} parent=35 // pred_region
          %259 = dma.done [#allocation6], 128
        $region48: #{tpu_custom_call.1} parent=35 // pred_fallthru
          _
        // Predicated region
        $region49: #{tpu_custom_call.1} parent=35 // pred_check
          %p260 = pneg %p131
        $region50: #{tpu_custom_call.1} parent=35 // pred_check_branch
          %262 = sbr.rel (%p260) target = $region52
        $region51: #{tpu_custom_call.1} parent=35 // pred_region
          %263 = dma.done [#allocation9], 2048
        $region52: #{tpu_custom_call.1} parent=35 // pred_fallthru
          _
        %s264 = sand.u32 %s45, 1
        %s265 = scalar_lea.sflag [#allocation3], %s264
        %s266 = sand.u32 %s45, 1
        %s267 = smul.addr %s266, 8
        %s268 = scalar_lea.vmem [#allocation2], %s267
        %p269 = pneg %p58
        %p270 = pneg %p55
        %p271 = pneg %p84
        %p272 = pneg %p81
        %p273 = pneg %p110
        %p274 = pneg %p107
        %p275 = pneg %p131
        %p276 = pneg %p128
        %p277 = pneg %p159
        %p278 = pneg %p156
        %s279 = sand.u32 %s146, 1
        %s280 = scalar_lea.sflag [#allocation4], %s279
        %s281 = sand.u32 %s146, 1
        %s282 = smul.addr %s281, 8
        %s283 = scalar_lea.vmem [#allocation10], %s282
        %v284 = vld [vmem:[%s247] sm:$0xff]
        %v285 = vld [vmem:[#allocation8] sm:$0xff]
        %v286 = vld [vmem:[#allocation8 + $0x8] sm:$0xff]
        %v287 = vld [vmem:[#allocation8 + $0x10] sm:$0xff]
        %v288 = vld [vmem:[#allocation8 + $0x18] sm:$0xff]
        %v289 = vld [vmem:[#allocation8 + $0x20] sm:$0xff]
        %v290 = vld [vmem:[#allocation8 + $0x28] sm:$0xff]
        %v291 = vld [vmem:[#allocation8 + $0x30] sm:$0xff]
        %v292 = vld [vmem:[#allocation8 + $0x38] sm:$0xff]
        %v293 = vld [vmem:[#allocation8 + $0x40] sm:$0xff]
        %v294 = vld [vmem:[#allocation8 + $0x48] sm:$0xff]
        %v295 = vld [vmem:[#allocation8 + $0x50] sm:$0xff]
        %v296 = vld [vmem:[#allocation8 + $0x58] sm:$0xff]
        %v297 = vld [vmem:[#allocation8 + $0x60] sm:$0xff]
        %v298 = vld [vmem:[#allocation8 + $0x68] sm:$0xff]
        %v299 = vld [vmem:[#allocation8 + $0x70] sm:$0xff]
        %v300 = vld [vmem:[#allocation8 + $0x78] sm:$0xff]
        %301 = vmatprep.subr.mxu0 0.0
        %302 = vmatpush1.msra.mxu0 %v300
        %303 = vmatprep.subr.mxu0 0.0
        %304 = vmatpush1.msra.mxu0 %v299
        %305 = vmatprep.subr.mxu0 0.0
        %306 = vmatpush1.msra.mxu0 %v298
        %307 = vmatprep.subr.mxu0 0.0
        %308 = vmatpush1.msra.mxu0 %v297
        %309 = vmatprep.subr.mxu0 0.0
        %310 = vmatpush1.msra.mxu0 %v296
        %311 = vmatprep.subr.mxu0 0.0
        %312 = vmatpush1.msra.mxu0 %v295
        %313 = vmatprep.subr.mxu0 0.0
        %314 = vmatpush1.msra.mxu0 %v294
        %315 = vmatprep.subr.mxu0 0.0
        %316 = vmatpush1.msra.mxu0 %v293
        %317 = vmatprep.subr.mxu0 0.0
        %318 = vmatpush1.msra.mxu0 %v292
        %319 = vmatprep.subr.mxu0 0.0
        %320 = vmatpush1.msra.mxu0 %v291
        %321 = vmatprep.subr.mxu0 0.0
        %322 = vmatpush1.msra.mxu0 %v290
        %323 = vmatprep.subr.mxu0 0.0
        %324 = vmatpush1.msra.mxu0 %v289
        %325 = vmatprep.subr.mxu0 0.0
        %326 = vmatpush1.msra.mxu0 %v288
        %327 = vmatprep.subr.mxu0 0.0
        %328 = vmatpush1.msra.mxu0 %v287
        %329 = vmatprep.subr.mxu0 0.0
        %330 = vmatpush1.msra.mxu0 %v286
        %331 = vmatprep.subr.mxu0 0.0
        %332 = vmatpush1.msra.mxu0 %v285
        %333 = vmatprep.subr.mxu0 0.0
        %334 = vmatpush2.msra.mxu0 0.0
        %335 = vmatprep.subr.mxu0 0.0
        %336 = vmatpush2.msra.mxu0 0.0
        %337 = vmatprep.subr.mxu0 0.0
        %338 = vmatpush2.msra.mxu0 0.0
        %339 = vmatprep.subr.mxu0 0.0
        %340 = vmatpush2.msra.mxu0 0.0
        %341 = vmatprep.subr.mxu0 0.0
        %342 = vmatpush2.msra.mxu0 0.0
        %343 = vmatprep.subr.mxu0 0.0
        %344 = vmatpush2.msra.mxu0 0.0
        %345 = vmatprep.subr.mxu0 0.0
        %346 = vmatpush2.msra.mxu0 0.0
        %347 = vmatprep.subr.mxu0 0.0
        %348 = vmatpush2.msra.mxu0 0.0
        %349 = vmatprep.subr.mxu0 0.0
        %350 = vmatpush2.msra.mxu0 0.0
        %351 = vmatprep.subr.mxu0 0.0
        %352 = vmatpush2.msra.mxu0 0.0
        %353 = vmatprep.subr.mxu0 0.0
        %354 = vmatpush2.msra.mxu0 0.0
        %355 = vmatprep.subr.mxu0 0.0
        %356 = vmatpush2.msra.mxu0 0.0
        %357 = vmatprep.subr.mxu0 0.0
        %358 = vmatpush2.msra.mxu0 0.0
        %359 = vmatprep.subr.mxu0 0.0
        %360 = vmatpush2.msra.mxu0 0.0
        %361 = vmatprep.subr.mxu0 0.0
        %362 = vmatpush2.msra.mxu0 0.0
        %363 = vmatprep.subr.mxu0 0.0
        %364 = vmatpush2.msra.mxu0 0.0
        %365 = vmatprep.mubr.f32.mxu0 0.0
        %366 = vmatmul.mubr.f32.gmra.mxu0 %v284
        %v367 = vpop.f32.mrf.mxu0
        %v368 = vadd.f32 0.0, %v367
        %v369 = vpop.f32.mrf.mxu0
        %370 = vdwg.mxu0
        %v371 = vld [vmem:[#allocation5] sm:$0xff]
        %v372 = vmul.f32 %v284, %v371
        %v373 = vld [vmem:[#allocation7] sm:$0xff]
        %v374 = vmul.f32 %v368, %v373
        %v375 = vadd.f32 %v372, %v374
        %376 = vst [vmem:[%s283] sm:$0xff] %v375
        %s377 = sand.u32 %s146, 1
        %s378 = scalar_lea.sflag [#allocation4], %s377
        %s379 = sand.u32 %s146, 1
        %s380 = smul.addr %s379, 8
        %s381 = scalar_lea.vmem [#allocation10], %s380
        // Predicated region
        $region53: #{tpu_custom_call.1} parent=35 // pred_check
          %p382 = pneg %p156
        $region54: #{tpu_custom_call.1} parent=35 // pred_check_branch
          %384 = sbr.rel (%p382) target = $region56
        $region55: #{tpu_custom_call.1} parent=35 // pred_region
          %s386 = ssub.s32 128, 128
          %387 = vsyncadd %s378, %s386
          %s388 = sadd.s32 %s27, %s28
          %s389 = smul.addr %s388, 128
          %s390 = scalar_lea.hbm %s4, %s389
          %s392 = sshll.u32 %s381, 4
          %s393 = int_to_ptr.vmem [resolvable:$true] %s392
          %395 = dma.vmem_to_hbm [thread:$0]  %s393, 128, %s390, %s378
        $region56: #{tpu_custom_call.1} parent=35 // pred_fallthru
          _
      $region36: #{tpu_custom_call.1} parent=5 // pred_fallthru
        _
      %p396 = scmp.le.s32.totalorder 2, %s18
      // Predicated region
      $region57: #{tpu_custom_call.1} parent=5 // pred_check
        %p397 = pneg %p396
      $region58: #{tpu_custom_call.1} parent=5 // pred_check_branch
        %399 = sbr.rel (%p397) target = $region60
      $region59: #{tpu_custom_call.1} parent=5 // pred_region
        %s400 = ssub.s32 %s18, 2
        // Predicated region
        $region61: #{tpu_custom_call.1} parent=59 // pred_check
          %p401 = pneg %p162
        $region62: #{tpu_custom_call.1} parent=59 // pred_check_branch
          %403 = sbr.rel (%p401) target = $region64
        $region63: #{tpu_custom_call.1} parent=59 // pred_region
          %s404 = sand.u32 %s147, 1
          %s405 = scalar_lea.sflag [#allocation4], %s404
          %s406 = sand.u32 %s147, 1
          %s407 = smul.addr %s406, 8
          %s408 = scalar_lea.vmem [#allocation10], %s407
          %409 = dma.done %s405, 128
        $region64: #{tpu_custom_call.1} parent=59 // pred_fallthru
          _
      $region60: #{tpu_custom_call.1} parent=5 // pred_fallthru
        _
    $region6: #{tpu_custom_call.1} parent=1 // loop_footer
      %s22 = sadd.s32 1, %s18
    $region7: #{tpu_custom_call.1} parent=1 // loop_footer_branch
      %17 = sbr.rel target = $region3
    $region8: #{tpu_custom_call.1} parent=1 // loop_exit
      _
    %410 = vsyncpa [#allocation3], 1
    %s411 = scalar_lea.sflag [#allocation3], 1
    %412 = vsyncpa %s411, 1
    %413 = vsyncpa [#allocation6], 1
    %414 = vsyncpa [#allocation9], 1
    %415 = vsyncpa [#allocation4], 1
    %s416 = scalar_lea.sflag [#allocation4], 1
    %417 = vsyncpa %s416, 1

</llo_original>
